<compile_context>
chip_gen: v6e
topology: v6e:2x2x1
jax: 0.10.0
libtpu: 0.0.40
codegen_flags: <defaults>
</compile_context>

<pallas_src>
import functools

import jax
import jax.numpy as jnp
import numpy as np
from jax.experimental import pallas as pl
from jax.experimental.pallas import tpu as pltpu

_NEG_INF = -1e30  # finite "minus infinity" so padded classes never produce NaN


def _round_up(a: int, m: int) -> int:
    return -(-a // m) * m


# ----------------------------------------------------------------------------
# Kernels
# ----------------------------------------------------------------------------
def _log_softmax_epilogue(acc, b_ref, o_ref):
    """acc: [TB, C_pad] f32 logits w/o bias; writes log-softmax to o_ref."""
    logits = acc + b_ref[...]                           # [TB, C_pad] f32
    m = jnp.max(logits, axis=1, keepdims=True)          # [TB, 1]
    shifted = logits - m
    lse = jnp.log(jnp.sum(jnp.exp(shifted), axis=1, keepdims=True))
    o_ref[...] = (shifted - lse).astype(o_ref.dtype)


def _resident_kernel(x_ref, w_ref, b_ref, o_ref):
    # Single K step: the weight block index is constant across the batch grid
    # axis, so Pallas fetches the whole (padded) weight from HBM once and keeps
    # it resident in VMEM.  No accumulator round-trip at all.
    acc = jax.lax.dot_general(
        x_ref[...], w_ref[...],
        dimension_numbers=(((1,), (1,)), ((), ())),     # contract D directly
        preferred_element_type=jnp.float32,
    )
    _log_softmax_epilogue(acc, b_ref, o_ref)


def _streamed_kernel(x_ref, w_ref, b_ref, o_ref, acc_ref):
    # K-tiled fallback for weights too large to keep resident. nk >= 2 here.
    k = pl.program_id(1)
    nk = pl.num_programs(1)

    partial = jax.lax.dot_general(
        x_ref[...], w_ref[...],
        dimension_numbers=(((1,), (1,)), ((), ())),
        preferred_element_type=jnp.float32,
    )

    @pl.when(k == 0)
    def _():
        acc_ref[...] = partial            # direct assign: no zero-fill store

    @pl.when(jnp.logical_and(k > 0, k < nk - 1))
    def _():
        acc_ref[...] += partial

    @pl.when(k == nk - 1)
    def _():
        # Fold the last partial product in registers; no extra acc store/load.
        _log_softmax_epilogue(acc_ref[...] + partial, b_ref, o_ref)


# ----------------------------------------------------------------------------
# Generation-aware tile / VMEM planning
# ----------------------------------------------------------------------------
def _vmem_limit_bytes() -> int:
    try:
        cap = int(pltpu.get_tpu_info().vmem_capacity_bytes)
    except Exception:
        cap = 64 * 1024 * 1024          # conservative (v7x-sized) fallback
    # Leave headroom for compiler-internal scratch.
    return int(min(cap - 8 * 1024 * 1024, cap * 0.85))


def _tile_plan(B, D, C, in_bytes, out_bytes, budget, force_stream):
    """Returns (TB, TK, B_pad, D_pad, C_pad)."""
    C_pad = _round_up(C, 128)
    B_al = _round_up(B, 8)
    D_full = _round_up(D, 128)

    def fits(tb, tk, with_acc):
        w = 2 * C_pad * tk * in_bytes          # (double-)buffered weight tile
        xb = 2 * tb * tk * in_bytes            # double-buffered x tile
        bb = 2 * C_pad * 4                     # bias slab
        ob = 2 * tb * C_pad * out_bytes        # double-buffered output tile
        acc = tb * C_pad * 4 if with_acc else 0
        return w + xb + bb + ob + acc <= budget

    # Cap TB: never bigger than the (8-aligned) batch, and on 2-TC parts give
    # the "parallel" batch axis at least two programs whenever B allows it.
    tb_cap = min(1024, B_al)
    if B_al >= 16:
        tb_cap = min(tb_cap, _round_up(-(-B_al // 2), 8))

    candidates = []
    if not force_stream:
        candidates.append((D_full, False))     # weight fully VMEM-resident
    candidates += [(tk, True) for tk in (512, 256, 128) if tk < D_full]

    for tk, with_acc in candidates:
        tb = tb_cap
        while tb >= 8:
            if fits(tb, tk, with_acc):
                return tb, tk, _round_up(B, tb), _round_up(D, tk), C_pad
            tb -= 8
    # Last resort: minimal tiles; the vmem limit / compiler sort out the rest.
    return 8, 128, _round_up(B, 8), _round_up(D, 128), C_pad


# ----------------------------------------------------------------------------
# Wrapper
# ----------------------------------------------------------------------------
@functools.partial(jax.jit, static_argnames=("matmul_dtype", "_force_stream"))
def linear_logsoftmax(x, weight, bias, *, matmul_dtype=None, _force_stream=False):
    B, D = x.shape
    C, D2 = weight.shape
    assert D == D2 and bias.shape == (C,)

    out_dtype = x.dtype
    if matmul_dtype is None:
        in_dtype = x.dtype
    elif matmul_dtype == "bfloat16":
        in_dtype = jnp.bfloat16
    elif matmul_dtype == "float32":
        in_dtype = jnp.float32
    else:
        in_dtype = np.dtype(matmul_dtype)
    in_bytes = np.dtype(in_dtype).itemsize
    out_bytes = np.dtype(out_dtype).itemsize

    vmem_limit = _vmem_limit_bytes()
    plan_budget = int(vmem_limit * 0.9)
    TB, TK, B_pad, D_pad, C_pad = _tile_plan(
        B, D, C, in_bytes, out_bytes, plan_budget, _force_stream)
    nb, nk = B_pad // TB, D_pad // TK

    # ---- Pad / cast inputs only when actually needed -----------------------
    if (B_pad, D_pad) != (B, D):
        x_p = jnp.zeros((B_pad, D_pad), in_dtype).at[:B, :D].set(x.astype(in_dtype))
    else:
        x_p = x.astype(in_dtype)
    if (C_pad, D_pad) != (C, D):
        w_p = jnp.zeros((C_pad, D_pad), in_dtype).at[:C, :D].set(weight.astype(in_dtype))
    else:
        w_p = weight.astype(in_dtype)
    if C_pad != C:
        # Padded classes get a huge negative bias -> exp() == 0 in the softmax.
        b_p = jnp.full((1, C_pad), _NEG_INF, jnp.float32).at[0, :C].set(
            bias.astype(jnp.float32))
    else:
        b_p = bias.astype(jnp.float32).reshape(1, C_pad)

    cost = pl.CostEstimate(
        flops=2 * B_pad * D_pad * C_pad,
        transcendentals=B_pad * C_pad,
        bytes_accessed=(B_pad * D_pad * in_bytes
                        + C_pad * D_pad * in_bytes * (1 if nk == 1 else nb)
                        + C_pad * 4
                        + B_pad * C_pad * out_bytes),
    )

    if nk == 1:
        # Weight-resident path: single grid axis over batch tiles.
        grid_spec = pltpu.PrefetchScalarGridSpec(
            num_scalar_prefetch=0,
            grid=(nb,),
            in_specs=[
                pl.BlockSpec((TB, D_pad), lambda i: (i, 0)),        # x tile
                pl.BlockSpec((C_pad, D_pad), lambda i: (0, 0)),     # resident W
                pl.BlockSpec((1, C_pad), lambda i: (0, 0)),         # bias slab
            ],
            out_specs=pl.BlockSpec((TB, C_pad), lambda i: (i, 0)),
            scratch_shapes=[],
        )
        kernel = _resident_kernel
        dims = ("parallel",)
    else:
        # Streamed path: K axis last ("arbitrary"), f32 accumulator scratch.
        grid_spec = pltpu.PrefetchScalarGridSpec(
            num_scalar_prefetch=0,
            grid=(nb, nk),
            in_specs=[
                pl.BlockSpec((TB, TK), lambda i, k: (i, k)),        # x tile
                pl.BlockSpec((C_pad, TK), lambda i, k: (0, k)),     # W tile
                pl.BlockSpec((1, C_pad), lambda i, k: (0, 0)),      # bias slab
            ],
            out_specs=pl.BlockSpec((TB, C_pad), lambda i, k: (i, 0)),
            scratch_shapes=[pltpu.VMEM((TB, C_pad), jnp.float32)],
        )
        kernel = _streamed_kernel
        dims = ("parallel", "arbitrary")

    out_p = pl.pallas_call(
        kernel,
        out_shape=jax.ShapeDtypeStruct((B_pad, C_pad), out_dtype),
        grid_spec=grid_spec,
        compiler_params=pltpu.CompilerParams(
            dimension_semantics=dims,
            vmem_limit_bytes=vmem_limit,
        ),
        cost_estimate=cost,
    )(x_p, w_p, b_p)

    return out_p[:B, :C]


def reference(x, weight, bias):
    logits = x @ weight.T + bias
    return jax.nn.log_softmax(logits, axis=1)


if __name__ == "__main__":
    key = jax.random.PRNGKey(0)

    # Small shapes consistent with the module: batch=8, input_dim=32, nclass=16.
    B, D, C = 8, 32, 16
    kx, kw, kb = jax.random.split(key, 3)
    x = jax.random.normal(kx, (B, D), dtype=jnp.float32)
    bound = 1.0 / (D ** 0.5)   # nn.Linear-style uniform init bound
    weight = jax.random.uniform(kw, (C, D), jnp.float32, -bound, bound)
    bias = jax.random.uniform(kb, (C,), jnp.float32, -bound, bound)

    ref = reference(x, weight, bias)

    # 1) f32 path (weight-resident single-shot kernel).
    out = jax.block_until_ready(linear_logsoftmax(x, weight, bias))
    assert out.shape == (B, C)
    assert jnp.allclose(out, ref, atol=1e-5, rtol=1e-5), "f32 mismatch vs reference"

    # 2) bf16 MXU inputs, f32 accumulation + f32 log-softmax epilogue.
    out_bf = jax.block_until_ready(
        linear_logsoftmax(x, weight, bias, matmul_dtype="bfloat16"))
    assert out_bf.shape == (B, C)
    assert jnp.allclose(out_bf, ref, atol=5e-2, rtol=5e-2), "bf16 mismatch vs reference"

    # 3) Streamed K-tiled path, exercised explicitly at a small shape.
    D2v = 640
    kx2, kw2, kb2 = jax.random.split(jax.random.PRNGKey(1), 3)
    x2 = jax.random.normal(kx2, (B, D2v), dtype=jnp.float32)
    bound2 = 1.0 / (D2v ** 0.5)
    w2 = jax.random.uniform(kw2, (C, D2v), jnp.float32, -bound2, bound2)
    b2 = jax.random.uniform(kb2, (C,), jnp.float32, -bound2, bound2)
    out2 = jax.block_until_ready(linear_logsoftmax(x2, w2, b2, _force_stream=True))
    ref2 = reference(x2, w2, b2)
    assert out2.shape == (B, C)
    assert jnp.allclose(out2, ref2, atol=5e-3, rtol=5e-3), "streamed-path mismatch"

    print("KERNEL_OK")
</pallas_src>

<mosaic_0001>
module attributes {stable_mosaic.version = 11 : i64} {
  func.func @_resident_kernel(%arg0: i32, %arg1: memref<8x128xf32, #tpu.memory_space<vmem>>, %arg2: memref<128x128xf32, #tpu.memory_space<vmem>>, %arg3: memref<1x128xf32, #tpu.memory_space<vmem>>, %arg4: memref<8x128xf32, #tpu.memory_space<vmem>>) attributes {dimension_semantics = [#tpu.dimension_semantics<parallel>], iteration_bounds = array<i64: 1>, scalar_prefetch = 0 : i64, scratch_operands = 0 : i64, tpu.core_type = #tpu.core_type<tc>, window_params = [{transform_indices = @transform_0, window_bounds = array<i64: 8, 128>}, {pipeline_mode = #tpu.pipeline_mode<synchronous>, transform_indices = @transform_1, window_bounds = array<i64: 128, 128>}, {pipeline_mode = #tpu.pipeline_mode<synchronous>, transform_indices = @transform_2, window_bounds = array<i64: 1, 128>}, {transform_indices = @transform_3, window_bounds = array<i64: 8, 128>}]} {
    %c0 = arith.constant 0 : index
    %c0_0 = arith.constant 0 : index
    %0 = vector.load %arg1[%c0, %c0_0] : memref<8x128xf32, #tpu.memory_space<vmem>>, vector<8x128xf32>
    %c0_1 = arith.constant 0 : index
    %c0_2 = arith.constant 0 : index
    %1 = vector.load %arg2[%c0_1, %c0_2] : memref<128x128xf32, #tpu.memory_space<vmem>>, vector<128x128xf32>
    %cst = arith.constant dense<0.000000e+00> : vector<8x128xf32>
    %2 = tpu.matmul %0, %1, %cst {dimension_numbers = #tpu.dot_dimension_numbers<[1], [1], [0], [0], [0, 0, 1, 0], [], []>} : vector<8x128xf32>, vector<128x128xf32>, vector<8x128xf32> -> vector<8x128xf32>
    %c0_3 = arith.constant 0 : index
    %c0_4 = arith.constant 0 : index
    %3 = vector.load %arg3[%c0_3, %c0_4] : memref<1x128xf32, #tpu.memory_space<vmem>>, vector<1x128xf32>
    %4 = vector.broadcast %3 : vector<1x128xf32> to vector<8x128xf32>
    %5 = arith.addf %2, %4 : vector<8x128xf32>
    %cst_5 = arith.constant dense<0xFF800000> : vector<8xf32>
    %6 = vector.multi_reduction <maximumf>, %5, %cst_5 [1] : vector<8x128xf32> to vector<8xf32>
    %7 = vector.shape_cast %6 : vector<8xf32> to vector<8x1xf32>
    %8 = vector.broadcast %7 : vector<8x1xf32> to vector<8x128xf32>
    %9 = arith.subf %5, %8 : vector<8x128xf32>
    %10 = math.exp %9 : vector<8x128xf32>
    %cst_6 = arith.constant dense<0.000000e+00> : vector<8xf32>
    %11 = vector.multi_reduction <add>, %10, %cst_6 [1] : vector<8x128xf32> to vector<8xf32>
    %12 = vector.shape_cast %11 : vector<8xf32> to vector<8x1xf32>
    %13 = math.log %12 : vector<8x1xf32>
    %14 = vector.broadcast %13 : vector<8x1xf32> to vector<8x128xf32>
    %15 = arith.subf %9, %14 : vector<8x128xf32>
    %c0_7 = arith.constant 0 : index
    %c0_8 = arith.constant 0 : index
    %16 = vector.load %arg4[%c0_7, %c0_8] : memref<8x128xf32, #tpu.memory_space<vmem>>, vector<8x128xf32>
    tpu.vector_store %arg4[%c0_7, %c0_8], %15 {strides = array<i32>} : memref<8x128xf32, #tpu.memory_space<vmem>>, vector<8x128xf32>,
    return
  }
  func.func @transform_0(%arg0: i32) -> (i32, i32) {
    %c0_i32 = arith.constant 0 : i32
    %c0_i32_0 = arith.constant 0 : i32
    return %arg0, %c0_i32 : i32, i32
  }
  func.func @transform_1(%arg0: i32) -> (i32, i32) {
    %c0_i32 = arith.constant 0 : i32
    %c0_i32_0 = arith.constant 0 : i32
    %c0_i32_1 = arith.constant 0 : i32
    return %c0_i32, %c0_i32_0 : i32, i32
  }
  func.func @transform_2(%arg0: i32) -> (i32, i32) {
    %c0_i32 = arith.constant 0 : i32
    %c0_i32_0 = arith.constant 0 : i32
    %c0_i32_1 = arith.constant 0 : i32
    return %c0_i32, %c0_i32_0 : i32, i32
  }
  func.func @transform_3(%arg0: i32) -> (i32, i32) {
    %c0_i32 = arith.constant 0 : i32
    %c0_i32_0 = arith.constant 0 : i32
    return %arg0, %c0_i32 : i32, i32
  }
}

</mosaic_0001>

<llo_original>
// kernel: linear_logsoftmax.1
$region0: #{linear_logsoftmax.1}
  #allocation0 [shape = 'u32[]', space=smem, size = 0x4, offset = 0x4, fixed_abs, tag = 'smem constant byte address 0x4 - core index']
  #allocation1 [shape = 'u32[144,128]{1,0:T(1,128)}', space=vmem, size = 0x12000, scoped, tag = 'internal scratch']
  %s0 = inlined_call_operand.vmem [shape: f32[8,128], index: 0, kind: input, shape index: {}]
  %s1 = inlined_call_operand.vmem [shape: f32[128,128], index: 1, kind: input, shape index: {}]
  %s2 = inlined_call_operand.vmem [shape: f32[1,128], index: 2, kind: input, shape index: {}]
  %s3 = inlined_call_operand.hbm [shape: f32[8,128], index: 3, kind: output, shape index: {}]
  %s4 = sld [smem:[#allocation0]]
  $region22: #{linear_logsoftmax.1} parent=0
    _
  %s6 = ssub.s32 1, %s4
  %s7 = scalar_select 0, %s6, %s4
  $region1: #{linear_logsoftmax.1} parent=0
    #allocation2 [shape = 'u8[4096]{0}', space=vmem, size = 0x1000, scoped, tag = 'output window, operand 0, single buffered']
    #allocation3 [shape = 's32[1]{0}', space=sflag, size = 0x4, scoped, tag = 'scoped memory for linear_logsoftmax.1']
    %8 = vsyncpa [#allocation3], 0
    // Predicated region
    $region2: #{linear_logsoftmax.1} parent=1 // pred_check
      _
    $region3: #{linear_logsoftmax.1} parent=1 // pred_check_branch
      %10 = sbr.rel (0) target = $region5
    $region4: #{linear_logsoftmax.1} parent=1 // pred_region
      _
    $region5: #{linear_logsoftmax.1} parent=1 // pred_fallthru
      _
    // Predicated region
    $region6: #{linear_logsoftmax.1} parent=1 // pred_check
      _
    $region7: #{linear_logsoftmax.1} parent=1 // pred_check_branch
      %12 = sbr.rel (0) target = $region9
    $region8: #{linear_logsoftmax.1} parent=1 // pred_region
      _
    $region9: #{linear_logsoftmax.1} parent=1 // pred_fallthru
      _
    // Predicated region
    $region10: #{linear_logsoftmax.1} parent=1 // pred_check
      _
    $region11: #{linear_logsoftmax.1} parent=1 // pred_check_branch
      %14 = sbr.rel (0) target = $region13
    $region12: #{linear_logsoftmax.1} parent=1 // pred_region
      _
    $region13: #{linear_logsoftmax.1} parent=1 // pred_fallthru
      _
    %v15 = vld [vmem:[%s0] sm:$0xff]
    %v16 = vld [vmem:[%s1] sm:$0xff]
    %v17 = vld [vmem:[%s1 + $0x8] sm:$0xff]
    %v18 = vld [vmem:[%s1 + $0x10] sm:$0xff]
    %v19 = vld [vmem:[%s1 + $0x18] sm:$0xff]
    %v20 = vld [vmem:[%s1 + $0x20] sm:$0xff]
    %v21 = vld [vmem:[%s1 + $0x28] sm:$0xff]
    %v22 = vld [vmem:[%s1 + $0x30] sm:$0xff]
    %v23 = vld [vmem:[%s1 + $0x38] sm:$0xff]
    %v24 = vld [vmem:[%s1 + $0x40] sm:$0xff]
    %v25 = vld [vmem:[%s1 + $0x48] sm:$0xff]
    %v26 = vld [vmem:[%s1 + $0x50] sm:$0xff]
    %v27 = vld [vmem:[%s1 + $0x58] sm:$0xff]
    %v28 = vld [vmem:[%s1 + $0x60] sm:$0xff]
    %v29 = vld [vmem:[%s1 + $0x68] sm:$0xff]
    %v30 = vld [vmem:[%s1 + $0x70] sm:$0xff]
    %v31 = vld [vmem:[%s1 + $0x78] sm:$0xff]
    %v32 = vld [vmem:[%s2] sm:$0x1]
    %v34 = vlaneseq
    %v35 = vshrl.u32 %v34, 7
    %v36 = vsub.s32 0, %v35
    %v37 = vrot.slane %v32, %v36
    %39 = vmatprep.subr.mxu0 0.0
    %40 = vmatpush1.xpose.msra.mxu0 %v31
    %41 = vmatprep.subr.mxu0 0.0
    %42 = vmatpush1.xpose.msra.mxu0 %v30
    %43 = vmatprep.subr.mxu0 0.0
    %44 = vmatpush1.xpose.msra.mxu0 %v29
    %45 = vmatprep.subr.mxu0 0.0
    %46 = vmatpush1.xpose.msra.mxu0 %v28
    %47 = vmatprep.subr.mxu0 0.0
    %48 = vmatpush1.xpose.msra.mxu0 %v27
    %49 = vmatprep.subr.mxu0 0.0
    %50 = vmatpush1.xpose.msra.mxu0 %v26
    %51 = vmatprep.subr.mxu0 0.0
    %52 = vmatpush1.xpose.msra.mxu0 %v25
    %53 = vmatprep.subr.mxu0 0.0
    %54 = vmatpush1.xpose.msra.mxu0 %v24
    %55 = vmatprep.subr.mxu0 0.0
    %56 = vmatpush1.xpose.msra.mxu0 %v23
    %57 = vmatprep.subr.mxu0 0.0
    %58 = vmatpush1.xpose.msra.mxu0 %v22
    %59 = vmatprep.subr.mxu0 0.0
    %60 = vmatpush1.xpose.msra.mxu0 %v21
    %61 = vmatprep.subr.mxu0 0.0
    %62 = vmatpush1.xpose.msra.mxu0 %v20
    %63 = vmatprep.subr.mxu0 0.0
    %64 = vmatpush1.xpose.msra.mxu0 %v19
    %65 = vmatprep.subr.mxu0 0.0
    %66 = vmatpush1.xpose.msra.mxu0 %v18
    %67 = vmatprep.subr.mxu0 0.0
    %68 = vmatpush1.xpose.msra.mxu0 %v17
    %69 = vmatprep.subr.mxu0 0.0
    %70 = vmatpush1.xpose.msra.mxu0 %v16
    %71 = vmatprep.subr.mxu0 0.0
    %72 = vmatpush2.xpose.msra.mxu0 0.0
    %73 = vmatprep.subr.mxu0 0.0
    %74 = vmatpush2.xpose.msra.mxu0 0.0
    %75 = vmatprep.subr.mxu0 0.0
    %76 = vmatpush2.xpose.msra.mxu0 0.0
    %77 = vmatprep.subr.mxu0 0.0
    %78 = vmatpush2.xpose.msra.mxu0 0.0
    %79 = vmatprep.subr.mxu0 0.0
    %80 = vmatpush2.xpose.msra.mxu0 0.0
    %81 = vmatprep.subr.mxu0 0.0
    %82 = vmatpush2.xpose.msra.mxu0 0.0
    %83 = vmatprep.subr.mxu0 0.0
    %84 = vmatpush2.xpose.msra.mxu0 0.0
    %85 = vmatprep.subr.mxu0 0.0
    %86 = vmatpush2.xpose.msra.mxu0 0.0
    %87 = vmatprep.subr.mxu0 0.0
    %88 = vmatpush2.xpose.msra.mxu0 0.0
    %89 = vmatprep.subr.mxu0 0.0
    %90 = vmatpush2.xpose.msra.mxu0 0.0
    %91 = vmatprep.subr.mxu0 0.0
    %92 = vmatpush2.xpose.msra.mxu0 0.0
    %93 = vmatprep.subr.mxu0 0.0
    %94 = vmatpush2.xpose.msra.mxu0 0.0
    %95 = vmatprep.subr.mxu0 0.0
    %96 = vmatpush2.xpose.msra.mxu0 0.0
    %97 = vmatprep.subr.mxu0 0.0
    %98 = vmatpush2.xpose.msra.mxu0 0.0
    %99 = vmatprep.subr.mxu0 0.0
    %100 = vmatpush2.xpose.msra.mxu0 0.0
    %101 = vmatprep.subr.mxu0 0.0
    %102 = vmatpush2.xpose.msra.mxu0 0.0
    %103 = vmatprep.mubr.f32.mxu0 0.0
    %104 = vmatmul.mubr.f32.gmra.mxu0 %v15
    %v105 = vpop.f32.mrf.mxu0
    %v106 = vadd.f32 %v37, %v105
    %v107 = vpop.f32.mrf.mxu0
    %108 = vdwg.mxu0
    %109 = vmax.xlane.f32.xlu0 %v106
    %v110 = vpop.xlane.xlu0 %109
    %v111 = vsub.f32 %v106, %v110
    %v112 = vmul.f32 %v111, 1.442695
    %v113 = vpow.pop %v112
    %114 = vadd.xlane.f32.xlu0 %v113
    %v115 = vpop.xlane.xlu0 %114
    %v116 = vlog2.pop %v115
    %v117 = vmul.f32 %v116, 0.6931472
    %v118 = vsub.f32 %v111, %v117
    %119 = vst [vmem:[#allocation2] sm:$0xff] %v118
    // Predicated region
    $region14: #{linear_logsoftmax.1} parent=1 // pred_check
      _
    $region15: #{linear_logsoftmax.1} parent=1 // pred_check_branch
      %121 = sbr.rel (0) target = $region17
    $region16: #{linear_logsoftmax.1} parent=1 // pred_region
      %s123 = ssub.s32 128, 128
      %124 = vsyncadd [#allocation3], %s123
      %s126 = sshll.u32 [#allocation2], 4
      %s127 = int_to_ptr.vmem [resolvable:$true] %s126
      %129 = dma.vmem_to_hbm [thread:$0]  %s127, 128, %s3, [#allocation3]
    $region17: #{linear_logsoftmax.1} parent=1 // pred_fallthru
      _
    // Predicated region
    $region18: #{linear_logsoftmax.1} parent=1 // pred_check
      _
    $region19: #{linear_logsoftmax.1} parent=1 // pred_check_branch
      %131 = sbr.rel (0) target = $region21
    $region20: #{linear_logsoftmax.1} parent=1 // pred_region
      %132 = dma.done [#allocation3], 128
    $region21: #{linear_logsoftmax.1} parent=1 // pred_fallthru
      _
    %133 = vsyncpa [#allocation3], 1

</llo_original>
